<compile_context>
chip_gen: v7x
topology: tpu7x:2x2x1
jax: 0.10.0
libtpu: 0.0.40
codegen_flags: <defaults>
</compile_context>

<pallas_src>
import jax
import jax.numpy as jnp
from jax import lax
from jax.experimental import pallas as pl
from jax.experimental.pallas import tpu as pltpu

EPS = 1e-5  # nn.BatchNorm2d default eps


# --------------------------------------------------------------------------- #
# Kernels
# --------------------------------------------------------------------------- #
def _bn_stats_kernel(x_ref, sum_ref, sq_ref):
    """Accumulate per-row (= per (n, c)) sum and sum-of-squares over HW tiles."""
    @pl.when(pl.program_id(1) == 0)
    def _init():
        sum_ref[...] = jnp.zeros_like(sum_ref)
        sq_ref[...] = jnp.zeros_like(sq_ref)

    x = x_ref[...].astype(jnp.float32)                       # (row_blk, hw_tile)
    sum_ref[...] += jnp.sum(x, axis=1, keepdims=True)        # (row_blk, 1)
    sq_ref[...] += jnp.sum(x * x, axis=1, keepdims=True)     # (row_blk, 1)


def _bn_norm_kernel(x_ref, scale_ref, bias_ref, o_ref):
    """Fused per-row affine normalize: y = x * scale + bias."""
    x = x_ref[...].astype(jnp.float32)                       # (row_blk, hw_tile)
    y = x * scale_ref[...] + bias_ref[...]                   # scale/bias: (row_blk, 1)
    o_ref[...] = y.astype(o_ref.dtype)


# --------------------------------------------------------------------------- #
# Tiling / VMEM configuration
# --------------------------------------------------------------------------- #
def _vmem_config():
    """Generation-aware (scoped-VMEM limit, per-block byte budget).

    The block budget is sized against pass 2, which double-buffers both input
    and output (4x block bytes live in VMEM), plus headroom for the tiny
    stats / scale / bias blocks.
    """
    try:
        vmem_phys = pltpu.get_tpu_info().vmem_capacity_bytes
    except Exception:  # conservative fallback, safe on v5e / v6e / v7x
        vmem_phys = 64 << 20
    if vmem_phys >= (100 << 20):        # v5e / v6e: 128 MiB physical VMEM
        return 96 << 20, 16 << 20
    return 48 << 20, 8 << 20            # v7x: 64 MiB per TensorCore


def _pick_tiles(nr, hw, itemsize, budget):
    """Choose (row_blk, hw_tile, needs_pad) for the (nr, hw) 2-D view.

    The contiguous lane dimension (hw) is maximized first so each DMA row is
    as long as possible (hw_tile == hw makes the whole block one contiguous
    HBM chunk); only then is row_blk grown to fill the block budget.
    """
    row_min = 8 if nr % 8 == 0 else nr            # sublane-aligned minimal rows

    # Case 1: full rows fit the budget -> fully contiguous blocks.
    if row_min * hw * itemsize <= budget:
        row_blk = row_min
        if nr % 8 == 0:
            max_rows = min(nr, int(budget // (hw * itemsize)))
            for d in range(max_rows - max_rows % 8, 7, -8):
                if nr % d == 0:
                    row_blk = d
                    break
        return row_blk, hw, False

    # Case 2: split hw into the largest lane-aligned (x128) divisor that fits.
    if hw % 128 == 0:
        lane_cap = max(128, (int(budget // (row_min * itemsize)) // 128) * 128)
        for t in range(min(hw, lane_cap), 127, -128):
            if hw % t == 0:
                return row_min, t, False

    # Case 3: hw is not 128-divisible and too large for full-row blocks.
    # Caller zero-pads hw up to a multiple of 128 (stats-safe) and retries.
    return row_min, 0, True


# --------------------------------------------------------------------------- #
# Wrapper
# --------------------------------------------------------------------------- #
def batch_norm2d(x_nchw, gamma, beta, eps=EPS):
    """BatchNorm2d forward (training-mode batch stats) via Pallas.

    x_nchw: (N, C, H, W); gamma, beta: (C,). Returns (N, C, H, W).
    """
    N, C, H, W = x_nchw.shape
    HW = H * W
    NR = N * C
    itemsize = jnp.dtype(x_nchw.dtype).itemsize
    vmem_limit, block_budget = _vmem_config()

    x2 = x_nchw.reshape(NR, HW)                 # free view of contiguous NCHW

    row_blk, hw_tile, needs_pad = _pick_tiles(NR, HW, itemsize, block_budget)
    HW_p = HW
    if needs_pad:
        # Zero-pad HW to a lane multiple; zeros are stats-neutral with
        # count = N*H*W, and the padded output columns are sliced off below.
        HW_p = ((HW + 127) // 128) * 128
        x2 = jnp.pad(x2, ((0, 0), (0, HW_p - HW)))
        row_blk, hw_tile, _ = _pick_tiles(NR, HW_p, itemsize, block_budget)

    grid = (NR // row_blk, HW_p // hw_tile)

    # ---- pass 1: per-row sum / sum-of-squares (megacore-parallel rows) ------
    sum_x, sum_xx = pl.pallas_call(
        _bn_stats_kernel,
        out_shape=(jax.ShapeDtypeStruct((NR, 1), jnp.float32),
                   jax.ShapeDtypeStruct((NR, 1), jnp.float32)),
        grid=grid,
        in_specs=[pl.BlockSpec((row_blk, hw_tile), lambda ri, hi: (ri, hi))],
        out_specs=[pl.BlockSpec((row_blk, 1), lambda ri, hi: (ri, 0)),
                   pl.BlockSpec((row_blk, 1), lambda ri, hi: (ri, 0))],
        compiler_params=pltpu.CompilerParams(
            dimension_semantics=("parallel", "arbitrary"),
            vmem_limit_bytes=vmem_limit),
        cost_estimate=pl.CostEstimate(
            flops=3 * NR * HW_p, transcendentals=0,
            bytes_accessed=itemsize * NR * HW_p + 8 * NR),
    )(x2)

    # ---- tiny host-side finalize: fold stats + affine into scale/bias -------
    count = jnp.float32(N * HW)
    per_ch_sum = sum_x.reshape(N, C).sum(axis=0)              # (C,)
    per_ch_sq = sum_xx.reshape(N, C).sum(axis=0)              # (C,)
    mean = per_ch_sum / count
    var = jnp.maximum(per_ch_sq / count - mean * mean, 0.0)   # biased variance
    inv_std = lax.rsqrt(var + eps)
    g = gamma.astype(jnp.float32)
    b = beta.astype(jnp.float32)
    scale_c = g * inv_std                                     # (C,)
    bias_c = b - mean * scale_c                               # (C,)
    # Per-row (n, c) copies so pass 2 stays a pure 2-D lane-broadcast.
    scale_r = jnp.tile(scale_c, (N,)).reshape(NR, 1)
    bias_r = jnp.tile(bias_c, (N,)).reshape(NR, 1)

    # ---- pass 2: tiled fused normalize + affine ------------------------------
    y2 = pl.pallas_call(
        _bn_norm_kernel,
        out_shape=jax.ShapeDtypeStruct((NR, HW_p), x_nchw.dtype),
        grid=grid,
        in_specs=[
            pl.BlockSpec((row_blk, hw_tile), lambda ri, hi: (ri, hi)),
            pl.BlockSpec((row_blk, 1), lambda ri, hi: (ri, 0)),
            pl.BlockSpec((row_blk, 1), lambda ri, hi: (ri, 0)),
        ],
        out_specs=pl.BlockSpec((row_blk, hw_tile), lambda ri, hi: (ri, hi)),
        compiler_params=pltpu.CompilerParams(
            dimension_semantics=("parallel", "parallel"),
            vmem_limit_bytes=vmem_limit),
        cost_estimate=pl.CostEstimate(
            flops=2 * NR * HW_p, transcendentals=0,
            bytes_accessed=2 * itemsize * NR * HW_p + 8 * NR),
    )(x2, scale_r, bias_r)

    if HW_p != HW:
        y2 = y2[:, :HW]
    return y2.reshape(N, C, H, W)               # free reshape back to NCHW


# --------------------------------------------------------------------------- #
# Reference + self-test
# --------------------------------------------------------------------------- #
def _reference_bn(x, gamma, beta, eps=EPS):
    mean = jnp.mean(x, axis=(0, 2, 3), keepdims=True)
    var = jnp.mean((x - mean) ** 2, axis=(0, 2, 3), keepdims=True)
    g = gamma.reshape(1, -1, 1, 1)
    b = beta.reshape(1, -1, 1, 1)
    return (x - mean) / jnp.sqrt(var + eps) * g + b


if __name__ == "__main__":
    key = jax.random.PRNGKey(0)
    kx, kg, kb = jax.random.split(key, 3)

    N, C, H, W = 2, 4, 16, 16
    x = jax.random.normal(kx, (N, C, H, W), dtype=jnp.float32)
    # PyTorch default init is weight=1, bias=0; random affine exercises the
    # full path deterministically.
    gamma = 1.0 + 0.1 * jax.random.normal(kg, (C,), dtype=jnp.float32)
    beta = 0.1 * jax.random.normal(kb, (C,), dtype=jnp.float32)

    y = jax.jit(batch_norm2d)(x, gamma, beta)
    y = jax.block_until_ready(y)

    y_ref = _reference_bn(x, gamma, beta)
    assert jnp.allclose(y, y_ref, atol=1e-4, rtol=1e-4), "mismatch vs reference"

    print("KERNEL_OK")
</pallas_src>

<mosaic_0001>
module attributes {stable_mosaic.version = 11 : i64} {
  func.func @_bn_stats_kernel(%arg0: i32, %arg1: i32, %arg2: memref<8x256xf32, #tpu.memory_space<vmem>>, %arg3: memref<8x1xf32, #tpu.memory_space<vmem>>, %arg4: memref<8x1xf32, #tpu.memory_space<vmem>>) attributes {dimension_semantics = [#tpu.dimension_semantics<parallel>, #tpu.dimension_semantics<arbitrary>], iteration_bounds = array<i64: 1, 1>, scalar_prefetch = 0 : i64, scratch_operands = 0 : i64, tpu.core_type = #tpu.core_type<tc>, window_params = [{transform_indices = @transform_0, window_bounds = array<i64: 8, 256>}, {transform_indices = @transform_1, window_bounds = array<i64: 8, 1>}, {transform_indices = @transform_2, window_bounds = array<i64: 8, 1>}]} {
    %c0_i32 = arith.constant 0 : i32
    %0 = arith.cmpi eq, %arg1, %c0_i32 : i32
    %1 = arith.extui %0 : i1 to i32
    %c0_i32_0 = arith.constant 0 : i32
    %2 = arith.cmpi ne, %1, %c0_i32_0 : i32
    scf.if %2 {
      %cst_11 = arith.constant 0.000000e+00 : f32
      %15 = vector.broadcast %cst_11 : f32 to vector<8x1xf32>
      %c0_12 = arith.constant 0 : index
      %c0_13 = arith.constant 0 : index
      %16 = vector.load %arg3[%c0_12, %c0_13] : memref<8x1xf32, #tpu.memory_space<vmem>>, vector<8x1xf32>
      tpu.vector_store %arg3[%c0_12, %c0_13], %15 {strides = array<i32>} : memref<8x1xf32, #tpu.memory_space<vmem>>, vector<8x1xf32>,
      %cst_14 = arith.constant 0.000000e+00 : f32
      %17 = vector.broadcast %cst_14 : f32 to vector<8x1xf32>
      %c0_15 = arith.constant 0 : index
      %c0_16 = arith.constant 0 : index
      %18 = vector.load %arg4[%c0_15, %c0_16] : memref<8x1xf32, #tpu.memory_space<vmem>>, vector<8x1xf32>
      tpu.vector_store %arg4[%c0_15, %c0_16], %17 {strides = array<i32>} : memref<8x1xf32, #tpu.memory_space<vmem>>, vector<8x1xf32>,
    } else {
    }
    %c0 = arith.constant 0 : index
    %c0_1 = arith.constant 0 : index
    %3 = vector.load %arg2[%c0, %c0_1] : memref<8x256xf32, #tpu.memory_space<vmem>>, vector<8x256xf32>
    %c0_2 = arith.constant 0 : index
    %c0_3 = arith.constant 0 : index
    %4 = vector.load %arg3[%c0_2, %c0_3] : memref<8x1xf32, #tpu.memory_space<vmem>>, vector<8x1xf32>
    %cst = arith.constant dense<0.000000e+00> : vector<8xf32>
    %5 = vector.multi_reduction <add>, %3, %cst [1] : vector<8x256xf32> to vector<8xf32>
    %6 = vector.shape_cast %5 : vector<8xf32> to vector<8x1xf32>
    %7 = arith.addf %4, %6 : vector<8x1xf32>
    %c0_4 = arith.constant 0 : index
    %c0_5 = arith.constant 0 : index
    %8 = vector.load %arg3[%c0_4, %c0_5] : memref<8x1xf32, #tpu.memory_space<vmem>>, vector<8x1xf32>
    tpu.vector_store %arg3[%c0_4, %c0_5], %7 {strides = array<i32>} : memref<8x1xf32, #tpu.memory_space<vmem>>, vector<8x1xf32>,
    %c0_6 = arith.constant 0 : index
    %c0_7 = arith.constant 0 : index
    %9 = vector.load %arg4[%c0_6, %c0_7] : memref<8x1xf32, #tpu.memory_space<vmem>>, vector<8x1xf32>
    %10 = arith.mulf %3, %3 : vector<8x256xf32>
    %cst_8 = arith.constant dense<0.000000e+00> : vector<8xf32>
    %11 = vector.multi_reduction <add>, %10, %cst_8 [1] : vector<8x256xf32> to vector<8xf32>
    %12 = vector.shape_cast %11 : vector<8xf32> to vector<8x1xf32>
    %13 = arith.addf %9, %12 : vector<8x1xf32>
    %c0_9 = arith.constant 0 : index
    %c0_10 = arith.constant 0 : index
    %14 = vector.load %arg4[%c0_9, %c0_10] : memref<8x1xf32, #tpu.memory_space<vmem>>, vector<8x1xf32>
    tpu.vector_store %arg4[%c0_9, %c0_10], %13 {strides = array<i32>} : memref<8x1xf32, #tpu.memory_space<vmem>>, vector<8x1xf32>,
    return
  }
  func.func @transform_0(%arg0: i32, %arg1: i32) -> (i32, i32) {
    %c0_i32 = arith.constant 0 : i32
    return %arg0, %arg1 : i32, i32
  }
  func.func @transform_1(%arg0: i32, %arg1: i32) -> (i32, i32) {
    %c0_i32 = arith.constant 0 : i32
    %c0_i32_0 = arith.constant 0 : i32
    return %arg0, %c0_i32 : i32, i32
  }
  func.func @transform_2(%arg0: i32, %arg1: i32) -> (i32, i32) {
    %c0_i32 = arith.constant 0 : i32
    %c0_i32_0 = arith.constant 0 : i32
    return %arg0, %c0_i32 : i32, i32
  }
}

module attributes {stable_mosaic.version = 11 : i64} {
  func.func @_bn_norm_kernel(%arg0: i32, %arg1: i32, %arg2: memref<8x256xf32, #tpu.memory_space<vmem>>, %arg3: memref<8x1xf32, #tpu.memory_space<vmem>>, %arg4: memref<8x1xf32, #tpu.memory_space<vmem>>, %arg5: memref<8x256xf32, #tpu.memory_space<vmem>>) attributes {dimension_semantics = [#tpu.dimension_semantics<parallel>, #tpu.dimension_semantics<parallel>], iteration_bounds = array<i64: 1, 1>, scalar_prefetch = 0 : i64, scratch_operands = 0 : i64, tpu.core_type = #tpu.core_type<tc>, window_params = [{transform_indices = @transform_0, window_bounds = array<i64: 8, 256>}, {transform_indices = @transform_1, window_bounds = array<i64: 8, 1>}, {transform_indices = @transform_2, window_bounds = array<i64: 8, 1>}, {transform_indices = @transform_3, window_bounds = array<i64: 8, 256>}]} {
    %c0 = arith.constant 0 : index
    %c0_0 = arith.constant 0 : index
    %0 = vector.load %arg2[%c0, %c0_0] : memref<8x256xf32, #tpu.memory_space<vmem>>, vector<8x256xf32>
    %c0_1 = arith.constant 0 : index
    %c0_2 = arith.constant 0 : index
    %1 = vector.load %arg3[%c0_1, %c0_2] : memref<8x1xf32, #tpu.memory_space<vmem>>, vector<8x1xf32>
    %2 = vector.broadcast %1 : vector<8x1xf32> to vector<8x256xf32>
    %3 = arith.mulf %0, %2 : vector<8x256xf32>
    %c0_3 = arith.constant 0 : index
    %c0_4 = arith.constant 0 : index
    %4 = vector.load %arg4[%c0_3, %c0_4] : memref<8x1xf32, #tpu.memory_space<vmem>>, vector<8x1xf32>
    %5 = vector.broadcast %4 : vector<8x1xf32> to vector<8x256xf32>
    %6 = arith.addf %3, %5 : vector<8x256xf32>
    %c0_5 = arith.constant 0 : index
    %c0_6 = arith.constant 0 : index
    %7 = vector.load %arg5[%c0_5, %c0_6] : memref<8x256xf32, #tpu.memory_space<vmem>>, vector<8x256xf32>
    tpu.vector_store %arg5[%c0_5, %c0_6], %6 {strides = array<i32>} : memref<8x256xf32, #tpu.memory_space<vmem>>, vector<8x256xf32>,
    return
  }
  func.func @transform_0(%arg0: i32, %arg1: i32) -> (i32, i32) {
    %c0_i32 = arith.constant 0 : i32
    return %arg0, %arg1 : i32, i32
  }
  func.func @transform_1(%arg0: i32, %arg1: i32) -> (i32, i32) {
    %c0_i32 = arith.constant 0 : i32
    %c0_i32_0 = arith.constant 0 : i32
    return %arg0, %c0_i32 : i32, i32
  }
  func.func @transform_2(%arg0: i32, %arg1: i32) -> (i32, i32) {
    %c0_i32 = arith.constant 0 : i32
    %c0_i32_0 = arith.constant 0 : i32
    return %arg0, %c0_i32 : i32, i32
  }
  func.func @transform_3(%arg0: i32, %arg1: i32) -> (i32, i32) {
    %c0_i32 = arith.constant 0 : i32
    return %arg0, %arg1 : i32, i32
  }
}

</mosaic_0001>

<llo_original>
// kernel: tile.0
$region0: #{tile.0}
  %s0 = inlined_call_operand.vmem [shape: f32[2,4], index: 0, kind: input, shape index: {}]
  %s1 = inlined_call_operand.vmem [shape: f32[8,1], index: 1, kind: output, shape index: {}]
  $region1: #{tile.0} parent=0
    #allocation0 [shape = 'u8[4096]{0}', space=vmem, size = 0x1000, scoped, tag = 'scoped mem for input reshape']
    %s3 = sshllo.u32 0, 2
    %v4 = vld [vmem:[%s0] sm:%s3]
    %5 = vst [vmem:[#allocation0] sm:%s3] %v4
    %v6 = vld [vmem:[#allocation0] sm:$0x3]
    %vm7 = vcmask 7168
    %8 = vst.msk [vmem:[%s1] ss:$4 sm:$0x3] %vm7, %v6
    %v9 = vld [vmem:[#allocation0] sm:$0x3]
    %10 = vrot.lane.b32.xlu0 %v9, 127
    %v11 = vpop.permute.xlu0 %10
    %vm12 = vcmask 7168
    %s13 = scalar_lea.vmem %s1, 1
    %14 = vst.msk [vmem:[%s13] ss:$4 sm:$0x3] %vm12, %v11
    %v15 = vld [vmem:[#allocation0] sm:$0x3]
    %16 = vrot.lane.b32.xlu0 %v15, 126
    %v17 = vpop.permute.xlu0 %16
    %vm18 = vcmask 7168
    %s19 = scalar_lea.vmem %s1, 2
    %20 = vst.msk [vmem:[%s19] ss:$4 sm:$0x3] %vm18, %v17
    %v21 = vld [vmem:[#allocation0] sm:$0x3]
    %22 = vrot.lane.b32.xlu0 %v21, 125
    %v23 = vpop.permute.xlu0 %22
    %vm24 = vcmask 7168
    %s25 = scalar_lea.vmem %s1, 3
    %26 = vst.msk [vmem:[%s25] ss:$4 sm:$0x3] %vm24, %v23

// kernel: tile.18
$region0: #{tile.18}
  #allocation0 [shape = 's32[1]{0}', space=sflag, size = 0x4, scoped, tag = 'scoped memory for tile.18']
  %s0 = inlined_call_operand.vmem [shape: f32[4], index: 0, kind: input, shape index: {}]
  %s1 = inlined_call_operand.vmem [shape: f32[2,4], index: 1, kind: output, shape index: {}]
  // Predicated region
  $region2: #{tile.18} parent=0 // pred_check
    _
  $region3: #{tile.18} parent=0 // pred_check_branch
    %3 = sbr.rel (0) target = $region5
  $region4: #{tile.18} parent=0 // pred_region
    _
  $region5: #{tile.18} parent=0 // pred_fallthru
    _
  %v4 = vld [vmem:[%s0] ss:$0 sm:$0xff]
  %5 = vst [vmem:[%s1] sm:$0x3] %v4

// kernel: batch_norm2d.2
$region0: #{batch_norm2d.2}
  #allocation0 [shape = 'u32[]', space=smem, size = 0x4, offset = 0x4, fixed_abs, tag = 'smem constant byte address 0x4 - core index']
  #allocation1 [shape = 'u32[144,128]{1,0:T(1,128)}', space=vmem, size = 0x12000, scoped, tag = 'internal scratch']
  %s0 = inlined_call_operand.vmem [shape: f32[8,256], index: 0, kind: input, shape index: {}]
  %s1 = inlined_call_operand.vmem [shape: f32[8,1], index: 1, kind: output, shape index: {0}]
  %s2 = inlined_call_operand.vmem [shape: f32[8,1], index: 2, kind: output, shape index: {1}]
  %3 = xla_tuple %s1, %s2
  %s4 = sld [smem:[#allocation0]]
  $region26: #{batch_norm2d.2} parent=0
    _
  %s6 = ssub.s32 1, %s4
  %s7 = scalar_select 0, %s6, %s4
  // Predicated region
  $region2: #{batch_norm2d.2} parent=0 // pred_check
    _
  $region3: #{batch_norm2d.2} parent=0 // pred_check_branch
    %9 = sbr.rel (0) target = $region5
  $region4: #{batch_norm2d.2} parent=0 // pred_region
    _
  $region5: #{batch_norm2d.2} parent=0 // pred_fallthru
    _
  %p10 = scmp.eq.s32.totalorder 0, 0
  // Predicated region
  $region6: #{batch_norm2d.2} parent=0 // pred_check
    %p11 = pneg %p10
  $region7: #{batch_norm2d.2} parent=0 // pred_check_branch
    %13 = sbr.rel (%p11) target = $region9
  $region8: #{batch_norm2d.2} parent=0 // pred_region
    %vm14 = vcmask 7168
    %15 = vst.msk [vmem:[%s1] sm:$0xff] %vm14, 0.0
    %16 = vst.msk [vmem:[%s2] sm:$0xff] %vm14, 0.0
  $region9: #{batch_norm2d.2} parent=0 // pred_fallthru
    _
  %v17 = vld [vmem:[%s0] sm:$0xff]
  %v18 = vld [vmem:[%s0 + $0x8] sm:$0xff]
  %v19 = vld [vmem:[%s1] sm:$0xff]
  %v20 = vadd.f32 %v17, %v18
  %21 = vadd.xlane.f32.xlu0 %v20
  %v22 = vpop.xlane.xlu0 %21
  %v23 = vadd.f32 %v19, %v22
  %vm24 = vcmask 7168
  %25 = vst.msk [vmem:[%s1] sm:$0xff] %vm24, %v23
  %v26 = vld [vmem:[%s2] sm:$0xff]
  %v27 = vmul.f32 %v17, %v17
  %v28 = vmul.f32 %v18, %v18
  %v29 = vadd.f32 %v27, %v28
  %30 = vadd.xlane.f32.xlu0 %v29
  %v31 = vpop.xlane.xlu0 %30
  %v32 = vadd.f32 %v26, %v31
  %33 = vst.msk [vmem:[%s2] sm:$0xff] %vm24, %v32
  // Predicated region
  $region10: #{batch_norm2d.2} parent=0 // pred_check
    _
  $region11: #{batch_norm2d.2} parent=0 // pred_check_branch
    %35 = sbr.rel (0) target = $region13
  $region12: #{batch_norm2d.2} parent=0 // pred_region
    _
  $region13: #{batch_norm2d.2} parent=0 // pred_fallthru
    _
  // Predicated region
  $region14: #{batch_norm2d.2} parent=0 // pred_check
    _
  $region15: #{batch_norm2d.2} parent=0 // pred_check_branch
    %37 = sbr.rel (0) target = $region17
  $region16: #{batch_norm2d.2} parent=0 // pred_region
    _
  $region17: #{batch_norm2d.2} parent=0 // pred_fallthru
    _
  // Predicated region
  $region18: #{batch_norm2d.2} parent=0 // pred_check
    _
  $region19: #{batch_norm2d.2} parent=0 // pred_check_branch
    %39 = sbr.rel (0) target = $region21
  $region20: #{batch_norm2d.2} parent=0 // pred_region
    _
  $region21: #{batch_norm2d.2} parent=0 // pred_fallthru
    _
  // Predicated region
  $region22: #{batch_norm2d.2} parent=0 // pred_check
    _
  $region23: #{batch_norm2d.2} parent=0 // pred_check_branch
    %41 = sbr.rel (0) target = $region25
  $region24: #{batch_norm2d.2} parent=0 // pred_region
    _
  $region25: #{batch_norm2d.2} parent=0 // pred_fallthru
    _

// kernel: batch_norm2d.3
$region0: #{batch_norm2d.3}
  #allocation0 [shape = 'u32[]', space=smem, size = 0x4, offset = 0x4, fixed_abs, tag = 'smem constant byte address 0x4 - core index']
  #allocation1 [shape = 'u32[144,128]{1,0:T(1,128)}', space=vmem, size = 0x12000, scoped, tag = 'internal scratch']
  %s0 = inlined_call_operand.vmem [shape: f32[8,256], index: 0, kind: input, shape index: {}]
  %s1 = inlined_call_operand.vmem [shape: f32[8,1], index: 1, kind: input, shape index: {}]
  %s2 = inlined_call_operand.vmem [shape: f32[8,1], index: 2, kind: input, shape index: {}]
  %s3 = inlined_call_operand.vmem [shape: f32[8,256], index: 3, kind: output, shape index: {}]
  %s4 = sld [smem:[#allocation0]]
  $region22: #{batch_norm2d.3} parent=0
    _
  %s6 = ssub.s32 1, %s4
  %s7 = scalar_select 0, %s6, %s4
  // Predicated region
  $region2: #{batch_norm2d.3} parent=0 // pred_check
    _
  $region3: #{batch_norm2d.3} parent=0 // pred_check_branch
    %9 = sbr.rel (0) target = $region5
  $region4: #{batch_norm2d.3} parent=0 // pred_region
    _
  $region5: #{batch_norm2d.3} parent=0 // pred_fallthru
    _
  // Predicated region
  $region6: #{batch_norm2d.3} parent=0 // pred_check
    _
  $region7: #{batch_norm2d.3} parent=0 // pred_check_branch
    %11 = sbr.rel (0) target = $region9
  $region8: #{batch_norm2d.3} parent=0 // pred_region
    _
  $region9: #{batch_norm2d.3} parent=0 // pred_fallthru
    _
  // Predicated region
  $region10: #{batch_norm2d.3} parent=0 // pred_check
    _
  $region11: #{batch_norm2d.3} parent=0 // pred_check_branch
    %13 = sbr.rel (0) target = $region13
  $region12: #{batch_norm2d.3} parent=0 // pred_region
    _
  $region13: #{batch_norm2d.3} parent=0 // pred_fallthru
    _
  %v14 = vld [vmem:[%s0] sm:$0xff]
  %v15 = vld [vmem:[%s0 + $0x8] sm:$0xff]
  %v16 = vld [vmem:[%s1] sm:$0xff]
  %18 = vset.pattern.permute.xlu0 0
  %19 = vperm.xlu0 %18, %v16
  %v20 = vpop.permute.xlu0 %19
  %v22 = vmul.f32 %v14, %v20
  %v23 = vmul.f32 %v15, %v20
  %v24 = vld [vmem:[%s2] sm:$0xff]
  %26 = vset.pattern.permute.xlu0 0
  %27 = vperm.xlu0 %26, %v24
  %v28 = vpop.permute.xlu0 %27
  %v30 = vadd.f32 %v22, %v28
  %v31 = vadd.f32 %v23, %v28
  %32 = vst [vmem:[%s3] sm:$0xff] %v30
  %33 = vst [vmem:[%s3 + $0x8] sm:$0xff] %v31
  // Predicated region
  $region14: #{batch_norm2d.3} parent=0 // pred_check
    _
  $region15: #{batch_norm2d.3} parent=0 // pred_check_branch
    %35 = sbr.rel (0) target = $region17
  $region16: #{batch_norm2d.3} parent=0 // pred_region
    _
  $region17: #{batch_norm2d.3} parent=0 // pred_fallthru
    _
  // Predicated region
  $region18: #{batch_norm2d.3} parent=0 // pred_check
    _
  $region19: #{batch_norm2d.3} parent=0 // pred_check_branch
    %37 = sbr.rel (0) target = $region21
  $region20: #{batch_norm2d.3} parent=0 // pred_region
    _
  $region21: #{batch_norm2d.3} parent=0 // pred_fallthru
    _

</llo_original>
